<compile_context>
chip_gen: v7x
topology: tpu7x:2x2x1
jax: 0.10.0
libtpu: 0.0.40
codegen_flags: <defaults>
</compile_context>

<pallas_src>
import math
from functools import partial

import jax
import jax.numpy as jnp
from jax import lax
from jax.experimental import pallas as pl
from jax.experimental.pallas import tpu as pltpu

D_IN = 2 * 64     # 128
D_HID = 128
N_CLS = 2
LN_EPS = 1e-5
_INV_SQRT2 = 1.0 / math.sqrt(2.0)


def _round_up(n, m):
    return ((n + m - 1) // m) * m


def _normalize(x):
    """LayerNorm normalization only (affine folded into the next linear).
    Single-pass variance: var = E[x^2] - E[x]^2."""
    mu = jnp.mean(x, axis=-1, keepdims=True)
    var = jnp.mean(x * x, axis=-1, keepdims=True) - mu * mu
    return (x - mu) * lax.rsqrt(var + LN_EPS)


def classifier_kernel(x_ref, w1_ref, b1_ref, wd_ref, bd_ref, out_ref):
    x = x_ref[...].astype(jnp.float32)                      # (TB, 128)

    # LayerNorm 1 (gamma/beta folded into w1/b1).
    xn = _normalize(x)

    # Linear 128 -> 128 on the MXU: bf16 inputs, f32 accumulation.
    h = jnp.dot(xn.astype(jnp.bfloat16), w1_ref[...],
                preferred_element_type=jnp.float32) + b1_ref[...]

    # GELU (exact erf form == nn.GELU() default).
    h = 0.5 * h * (1.0 + lax.erf(h * _INV_SQRT2))

    # Dropout(0.3): identity at inference.
    # TODO(synk): training-mode dropout (random mask + 1/(1-p) scale) not emitted.

    # LayerNorm 2 (gamma/beta folded into wd/bd).  (These are the torch module's
    # stored "embeddings"; not exported as a kernel output here.)
    hn = _normalize(h)

    # Two-class softmax == sigmoid of the logit difference:
    #   d = logit_1 - logit_0 ; p1 = 1/(1+exp(-d)) ; p0 = 1 - p1.
    d = jnp.sum(hn * wd_ref[...], axis=-1, keepdims=True) + bd_ref[...]   # (TB, 1)
    p1 = 1.0 / (1.0 + jnp.exp(-d))                                        # EUP exp
    col = lax.broadcasted_iota(jnp.int32, out_ref.shape, 1)               # (TB, 2)
    out_ref[...] = jnp.where(col == 0, 1.0 - p1, p1).astype(out_ref.dtype)


def fold_params(p):
    """One-time wrapper-side folds: LN affines into the linears, the 2-class head
    into a single logit-difference vector, and w1 -> bf16 for the MXU."""
    w1 = p["ln1_g"].reshape(-1, 1) * p["w1"]                 # (128, 128)
    b1 = p["b1"] + p["ln1_b"] @ p["w1"]                      # (1, 128)
    wd_raw = (p["w2"][:, 1] - p["w2"][:, 0]).reshape(1, -1)  # (1, 128)
    bd_raw = p["b2"][0, 1] - p["b2"][0, 0]                   # scalar
    wd = p["ln2_g"] * wd_raw
    bd = bd_raw + jnp.sum(p["ln2_b"] * wd_raw)
    return {
        "w1": w1.astype(jnp.bfloat16),
        "b1": b1.astype(jnp.float32),
        "wd": wd.astype(jnp.float32),
        "bd": jnp.reshape(bd, (1, 1)).astype(jnp.float32),
    }


@partial(jax.jit, static_argnames=("tb",))
def classifier_forward(x, folded, *, tb=2048):
    """x: (B, 128) float32 (or bfloat16). Returns (B, 2) float32 probabilities."""
    B = x.shape[0]
    tb = min(tb, _round_up(B, 8))          # keep sublane dim a multiple of 8
    Bp = _round_up(B, tb)
    if Bp != B:
        x = jnp.pad(x, ((0, Bp - B), (0, 0)))

    out = pl.pallas_call(
        classifier_kernel,
        out_shape=jax.ShapeDtypeStruct((Bp, N_CLS), jnp.float32),
        grid=(Bp // tb,),
        in_specs=[
            pl.BlockSpec((tb, D_IN), lambda i: (i, 0)),        # x: streamed per tile
            pl.BlockSpec((D_IN, D_HID), lambda i: (0, 0)),     # w1 (bf16): resident
            pl.BlockSpec((1, D_HID), lambda i: (0, 0)),        # b1: resident
            pl.BlockSpec((1, D_HID), lambda i: (0, 0)),        # wd: resident
            pl.BlockSpec((1, 1), lambda i: (0, 0)),            # bd: resident
        ],
        out_specs=pl.BlockSpec((tb, N_CLS), lambda i: (i, 0)),
        compiler_params=pltpu.CompilerParams(
            dimension_semantics=("parallel",),                 # batch over v7x TCs
        ),
    )(x, folded["w1"], folded["b1"], folded["wd"], folded["bd"])
    return out[:B]


def init_params(key):
    # Deterministic synthetic init (PyTorch-like uniform bounds for linears,
    # nontrivial LN affines so the fold path is actually exercised).
    k = jax.random.split(key, 8)
    bound1 = 1.0 / math.sqrt(D_IN)
    bound2 = 1.0 / math.sqrt(D_HID)
    return {
        "ln1_g": 1.0 + 0.1 * jax.random.normal(k[0], (1, D_IN), jnp.float32),
        "ln1_b": 0.1 * jax.random.normal(k[1], (1, D_IN), jnp.float32),
        "w1": jax.random.uniform(k[2], (D_IN, D_HID), jnp.float32, -bound1, bound1),
        "b1": jax.random.uniform(k[3], (1, D_HID), jnp.float32, -bound1, bound1),
        "ln2_g": 1.0 + 0.1 * jax.random.normal(k[4], (1, D_HID), jnp.float32),
        "ln2_b": 0.1 * jax.random.normal(k[5], (1, D_HID), jnp.float32),
        "w2": jax.random.uniform(k[6], (D_HID, N_CLS), jnp.float32, -bound2, bound2),
        "b2": jax.random.uniform(k[7], (1, N_CLS), jnp.float32, -bound2, bound2),
    }


def reference_forward(x, p):
    # Plain-JAX f32 reference with the original (unfolded) parameterization.
    def ln(v, g, b):
        mu = jnp.mean(v, axis=-1, keepdims=True)
        var = jnp.mean((v - mu) ** 2, axis=-1, keepdims=True)
        return (v - mu) * lax.rsqrt(var + LN_EPS) * g + b

    h = ln(x, p["ln1_g"], p["ln1_b"])
    h = h @ p["w1"] + p["b1"]
    h = 0.5 * h * (1.0 + lax.erf(h * _INV_SQRT2))
    h = ln(h, p["ln2_g"], p["ln2_b"])
    logits = h @ p["w2"] + p["b2"]
    return jax.nn.softmax(logits, axis=1)


if __name__ == "__main__":
    key = jax.random.PRNGKey(0)
    kx, kp = jax.random.split(key)
    params = init_params(kp)
    folded = fold_params(params)

    # Single small check that exercises the multi-tile grid AND the ragged-batch
    # padding path with one kernel compilation (B=40, tb=16 -> grid of 3, pad to 48).
    B = 40
    x = jax.random.normal(kx, (B, D_IN), jnp.float32)
    out = jax.block_until_ready(classifier_forward(x, folded, tb=16))
    ref = reference_forward(x, params)

    assert out.shape == (B, N_CLS)
    # bf16 MXU inputs + sigmoid-difference softmax -> loosened tolerance vs f32 ref.
    assert jnp.allclose(out, ref, atol=2e-2), "mismatch vs reference"
    assert jnp.allclose(jnp.sum(out, axis=1), 1.0, atol=1e-5), "rows must sum to 1"
    assert bool(jnp.all(out >= 0.0) & jnp.all(out <= 1.0)), "probs out of [0,1]"

    print("KERNEL_OK")
</pallas_src>

<mosaic_0001>
module attributes {stable_mosaic.version = 11 : i64} {
  func.func @classifier_kernel(%arg0: i32, %arg1: memref<16x128xf32, #tpu.memory_space<vmem>>, %arg2: memref<128x128xbf16, #tpu.memory_space<vmem>>, %arg3: memref<1x128xf32, #tpu.memory_space<vmem>>, %arg4: memref<1x128xf32, #tpu.memory_space<vmem>>, %arg5: memref<1x1xf32, #tpu.memory_space<vmem>>, %arg6: memref<16x2xf32, #tpu.memory_space<vmem>>) attributes {dimension_semantics = [#tpu.dimension_semantics<parallel>], iteration_bounds = array<i64: 3>, scalar_prefetch = 0 : i64, scratch_operands = 0 : i64, tpu.core_type = #tpu.core_type<tc>, window_params = [{transform_indices = @transform_0, window_bounds = array<i64: 16, 128>}, {pipeline_mode = #tpu.pipeline_mode<synchronous>, transform_indices = @transform_1, window_bounds = array<i64: 128, 128>}, {pipeline_mode = #tpu.pipeline_mode<synchronous>, transform_indices = @transform_2, window_bounds = array<i64: 1, 128>}, {pipeline_mode = #tpu.pipeline_mode<synchronous>, transform_indices = @transform_3, window_bounds = array<i64: 1, 128>}, {pipeline_mode = #tpu.pipeline_mode<synchronous>, transform_indices = @transform_4, window_bounds = array<i64: 1, 1>}, {transform_indices = @transform_5, window_bounds = array<i64: 16, 2>}]} {
    %c0 = arith.constant 0 : index
    %c0_0 = arith.constant 0 : index
    %0 = vector.load %arg1[%c0, %c0_0] : memref<16x128xf32, #tpu.memory_space<vmem>>, vector<16x128xf32>
    %cst = arith.constant dense<0.000000e+00> : vector<16xf32>
    %1 = vector.multi_reduction <add>, %0, %cst [1] : vector<16x128xf32> to vector<16xf32>
    %2 = vector.shape_cast %1 : vector<16xf32> to vector<16x1xf32>
    %cst_1 = arith.constant 1.280000e+02 : f32
    %3 = vector.broadcast %cst_1 : f32 to vector<16x1xf32>
    %4 = arith.divf %2, %3 : vector<16x1xf32>
    %5 = arith.mulf %0, %0 : vector<16x128xf32>
    %cst_2 = arith.constant dense<0.000000e+00> : vector<16xf32>
    %6 = vector.multi_reduction <add>, %5, %cst_2 [1] : vector<16x128xf32> to vector<16xf32>
    %7 = vector.shape_cast %6 : vector<16xf32> to vector<16x1xf32>
    %cst_3 = arith.constant 1.280000e+02 : f32
    %8 = vector.broadcast %cst_3 : f32 to vector<16x1xf32>
    %9 = arith.divf %7, %8 : vector<16x1xf32>
    %10 = arith.mulf %4, %4 : vector<16x1xf32>
    %11 = arith.subf %9, %10 : vector<16x1xf32>
    %12 = vector.broadcast %4 : vector<16x1xf32> to vector<16x128xf32>
    %13 = arith.subf %0, %12 : vector<16x128xf32>
    %cst_4 = arith.constant 9.99999974E-6 : f32
    %14 = vector.broadcast %cst_4 : f32 to vector<16x1xf32>
    %15 = arith.addf %11, %14 : vector<16x1xf32>
    %16 = math.rsqrt %15 : vector<16x1xf32>
    %17 = vector.broadcast %16 : vector<16x1xf32> to vector<16x128xf32>
    %18 = arith.mulf %13, %17 : vector<16x128xf32>
    %19 = arith.truncf %18 : vector<16x128xf32> to vector<16x128xbf16>
    %c0_5 = arith.constant 0 : index
    %c0_6 = arith.constant 0 : index
    %20 = vector.load %arg2[%c0_5, %c0_6] : memref<128x128xbf16, #tpu.memory_space<vmem>>, vector<128x128xbf16>
    %cst_7 = arith.constant dense<0.000000e+00> : vector<16x128xf32>
    %21 = tpu.matmul %19, %20, %cst_7 {dimension_numbers = #tpu.dot_dimension_numbers<[1], [0], [0], [1], [0, 0, 1, 1], [], []>} : vector<16x128xbf16>, vector<128x128xbf16>, vector<16x128xf32> -> vector<16x128xf32>
    %c0_8 = arith.constant 0 : index
    %c0_9 = arith.constant 0 : index
    %22 = vector.load %arg3[%c0_8, %c0_9] : memref<1x128xf32, #tpu.memory_space<vmem>>, vector<1x128xf32>
    %23 = vector.broadcast %22 : vector<1x128xf32> to vector<16x128xf32>
    %24 = arith.addf %21, %23 : vector<16x128xf32>
    %cst_10 = arith.constant 5.000000e-01 : f32
    %25 = vector.broadcast %cst_10 : f32 to vector<16x128xf32>
    %26 = arith.mulf %25, %24 : vector<16x128xf32>
    %cst_11 = arith.constant 0.707106769 : f32
    %27 = vector.broadcast %cst_11 : f32 to vector<16x128xf32>
    %28 = arith.mulf %24, %27 : vector<16x128xf32>
    %29 = math.erf %28 : vector<16x128xf32>
    %cst_12 = arith.constant 1.000000e+00 : f32
    %30 = vector.broadcast %cst_12 : f32 to vector<16x128xf32>
    %31 = arith.addf %30, %29 : vector<16x128xf32>
    %32 = arith.mulf %26, %31 : vector<16x128xf32>
    %cst_13 = arith.constant dense<0.000000e+00> : vector<16xf32>
    %33 = vector.multi_reduction <add>, %32, %cst_13 [1] : vector<16x128xf32> to vector<16xf32>
    %34 = vector.shape_cast %33 : vector<16xf32> to vector<16x1xf32>
    %cst_14 = arith.constant 1.280000e+02 : f32
    %35 = vector.broadcast %cst_14 : f32 to vector<16x1xf32>
    %36 = arith.divf %34, %35 : vector<16x1xf32>
    %37 = arith.mulf %32, %32 : vector<16x128xf32>
    %cst_15 = arith.constant dense<0.000000e+00> : vector<16xf32>
    %38 = vector.multi_reduction <add>, %37, %cst_15 [1] : vector<16x128xf32> to vector<16xf32>
    %39 = vector.shape_cast %38 : vector<16xf32> to vector<16x1xf32>
    %cst_16 = arith.constant 1.280000e+02 : f32
    %40 = vector.broadcast %cst_16 : f32 to vector<16x1xf32>
    %41 = arith.divf %39, %40 : vector<16x1xf32>
    %42 = arith.mulf %36, %36 : vector<16x1xf32>
    %43 = arith.subf %41, %42 : vector<16x1xf32>
    %44 = vector.broadcast %36 : vector<16x1xf32> to vector<16x128xf32>
    %45 = arith.subf %32, %44 : vector<16x128xf32>
    %cst_17 = arith.constant 9.99999974E-6 : f32
    %46 = vector.broadcast %cst_17 : f32 to vector<16x1xf32>
    %47 = arith.addf %43, %46 : vector<16x1xf32>
    %48 = math.rsqrt %47 : vector<16x1xf32>
    %49 = vector.broadcast %48 : vector<16x1xf32> to vector<16x128xf32>
    %50 = arith.mulf %45, %49 : vector<16x128xf32>
    %c0_18 = arith.constant 0 : index
    %c0_19 = arith.constant 0 : index
    %51 = vector.load %arg4[%c0_18, %c0_19] : memref<1x128xf32, #tpu.memory_space<vmem>>, vector<1x128xf32>
    %52 = vector.broadcast %51 : vector<1x128xf32> to vector<16x128xf32>
    %53 = arith.mulf %50, %52 : vector<16x128xf32>
    %cst_20 = arith.constant dense<0.000000e+00> : vector<16xf32>
    %54 = vector.multi_reduction <add>, %53, %cst_20 [1] : vector<16x128xf32> to vector<16xf32>
    %55 = vector.shape_cast %54 : vector<16xf32> to vector<16x1xf32>
    %c0_21 = arith.constant 0 : index
    %c0_22 = arith.constant 0 : index
    %56 = vector.load %arg5[%c0_21, %c0_22] : memref<1x1xf32, #tpu.memory_space<vmem>>, vector<1x1xf32>
    %57 = vector.broadcast %56 : vector<1x1xf32> to vector<16x1xf32>
    %58 = arith.addf %55, %57 : vector<16x1xf32>
    %cst_23 = arith.constant 0.000000e+00 : f32
    %59 = vector.broadcast %cst_23 : f32 to vector<16x1xf32>
    %60 = arith.subf %59, %58 : vector<16x1xf32>
    %61 = math.exp %60 : vector<16x1xf32>
    %cst_24 = arith.constant 1.000000e+00 : f32
    %62 = vector.broadcast %cst_24 : f32 to vector<16x1xf32>
    %63 = arith.addf %62, %61 : vector<16x1xf32>
    %cst_25 = arith.constant 1.000000e+00 : f32
    %64 = vector.broadcast %cst_25 : f32 to vector<16x1xf32>
    %65 = arith.divf %64, %63 : vector<16x1xf32>
    %66 = tpu.iota {dimensions = array<i32: 1>} : vector<16x2xi32>
    %c0_i32 = arith.constant 0 : i32
    %67 = vector.broadcast %c0_i32 : i32 to vector<16x2xi32>
    %68 = arith.cmpi eq, %66, %67 : vector<16x2xi32>
    %cst_26 = arith.constant 1.000000e+00 : f32
    %69 = vector.broadcast %cst_26 : f32 to vector<16x1xf32>
    %70 = arith.subf %69, %65 : vector<16x1xf32>
    %71 = vector.shape_cast %70 : vector<16x1xf32> to vector<16x1xf32>
    %72 = vector.broadcast %71 : vector<16x1xf32> to vector<16x2xf32>
    %73 = vector.shape_cast %65 : vector<16x1xf32> to vector<16x1xf32>
    %74 = vector.broadcast %73 : vector<16x1xf32> to vector<16x2xf32>
    %75 = arith.select %68, %72, %74 : vector<16x2xi1>, vector<16x2xf32>
    %c0_27 = arith.constant 0 : index
    %c0_28 = arith.constant 0 : index
    %76 = vector.load %arg6[%c0_27, %c0_28] : memref<16x2xf32, #tpu.memory_space<vmem>>, vector<16x2xf32>
    tpu.vector_store %arg6[%c0_27, %c0_28], %75 {strides = array<i32>} : memref<16x2xf32, #tpu.memory_space<vmem>>, vector<16x2xf32>,
    return
  }
  func.func @transform_0(%arg0: i32) -> (i32, i32) {
    %c0_i32 = arith.constant 0 : i32
    %c0_i32_0 = arith.constant 0 : i32
    return %arg0, %c0_i32 : i32, i32
  }
  func.func @transform_1(%arg0: i32) -> (i32, i32) {
    %c0_i32 = arith.constant 0 : i32
    %c0_i32_0 = arith.constant 0 : i32
    %c0_i32_1 = arith.constant 0 : i32
    return %c0_i32, %c0_i32_0 : i32, i32
  }
  func.func @transform_2(%arg0: i32) -> (i32, i32) {
    %c0_i32 = arith.constant 0 : i32
    %c0_i32_0 = arith.constant 0 : i32
    %c0_i32_1 = arith.constant 0 : i32
    return %c0_i32, %c0_i32_0 : i32, i32
  }
  func.func @transform_3(%arg0: i32) -> (i32, i32) {
    %c0_i32 = arith.constant 0 : i32
    %c0_i32_0 = arith.constant 0 : i32
    %c0_i32_1 = arith.constant 0 : i32
    return %c0_i32, %c0_i32_0 : i32, i32
  }
  func.func @transform_4(%arg0: i32) -> (i32, i32) {
    %c0_i32 = arith.constant 0 : i32
    %c0_i32_0 = arith.constant 0 : i32
    %c0_i32_1 = arith.constant 0 : i32
    return %c0_i32, %c0_i32_0 : i32, i32
  }
  func.func @transform_5(%arg0: i32) -> (i32, i32) {
    %c0_i32 = arith.constant 0 : i32
    %c0_i32_0 = arith.constant 0 : i32
    return %arg0, %c0_i32 : i32, i32
  }
}

</mosaic_0001>

<llo_original>
// kernel: classifier_forward.1
$region0: #{classifier_forward.1}
  #allocation0 [shape = 'u32[]', space=smem, size = 0x4, offset = 0x4, fixed_abs, tag = 'smem constant byte address 0x4 - core index']
  #allocation1 [shape = 'u32[144,128]{1,0:T(1,128)}', space=vmem, size = 0x12000, scoped, tag = 'internal scratch']
  #allocation2 [shape = 'f32[1,1]{1,0:T(1,128)S(1)}', space=vmem, size = 0x200, scoped, tag = 'scoped memory for classifier_forward.1']
  %s0 = inlined_call_operand.vmem [shape: f32[48,128], index: 0, kind: input, shape index: {}]
  %s1 = inlined_call_operand.vmem [shape: bf16[128,128], index: 1, kind: input, shape index: {}]
  %s2 = inlined_call_operand.vmem [shape: f32[1,128], index: 2, kind: input, shape index: {}]
  %s3 = inlined_call_operand.vmem [shape: f32[1,128], index: 3, kind: input, shape index: {}]
  %s4 = inlined_call_operand.<no memory space> [shape: f32[1,1], index: 4, kind: input, shape index: {}]
  %s5 = inlined_call_operand.vmem [shape: f32[48,2], index: 5, kind: output, shape index: {}]
  %s6 = sld [smem:[#allocation0]]
  $region53: #{classifier_forward.1} parent=0
    _
  %s8 = ssub.s32 1, %s6
  %s9 = scalar_select 0, %s8, %s6
  %v10 = vstv %s4
  %11 = vst [vmem:[#allocation2] sm:$0x1] %v10
  loop: start=0, step=1, limit=5
  $region2: #{classifier_forward.1} parent=0 // loop_pre_header
    _
  $region3: #{classifier_forward.1} parent=0 // loop_header
    %s13 = sphi 0, %s17
    %p14 = scmp.ge.s32.totalorder %s13, 5
    %s23 = sphi 0, %s25
    %s26 = sphi 0, %s23
    %s27 = sphi 0, %s26
    %s43 = sphi 0, %s27
    %s47 = sphi 0, %s47
    %s49 = sphi 0, %s47
    %s50 = sphi 0, %s49
    %s64 = sphi 0, %s50
    %s68 = sphi 0, %s68
    %s70 = sphi 0, %s68
    %s71 = sphi 0, %s70
    %s85 = sphi 0, %s71
    %s89 = sphi 0, %s89
    %s91 = sphi 0, %s89
    %s92 = sphi 0, %s91
    %s106 = sphi 0, %s92
    %s110 = sphi 0, %s110
    %s112 = sphi 0, %s110
    %s113 = sphi 0, %s112
    %s127 = sphi 0, %s113
    %s133 = sphi 0, %s135
    %s136 = sphi 0, %s133
    %s137 = sphi 0, %s136
    %s153 = sphi 0, %s137
  $region4: #{classifier_forward.1} parent=0 // loop_header_branch
    %16 = sbr.rel (%p14) target = $region8
  $region5: #{classifier_forward.1} parent=0 // loop_body
    %s18 = ssub.s32 %s13, 1
    %s19 = ssub.s32 %s13, 2
    %s20 = sadd.s32 %s13, 1
    %s21 = ssub.s32 %s13, %s20
    %p22 = scmp.eq.s32.totalorder %s21, 0
    %s24 = sadd.s32 %s23, 1
    %s25 = scalar_select %p22, %s23, %s24
    %p28 = pneg %p22
    %p29 = scmp.eq.s32.totalorder %s13, 2
    %p30 = por %p28, %p29
    %p31 = scmp.ne.s32.totalorder %s23, %s26
    %p32 = scmp.eq.s32.totalorder %s13, 0
    %p33 = por %p31, %p32
    %p34 = scmp.ne.s32.totalorder %s23, %s26
    %p35 = scmp.eq.s32.totalorder %s18, 2
    %p36 = por %p34, %p35
    %p37 = scmp.ne.s32.totalorder %s26, %s27
    %p38 = scmp.eq.s32.totalorder %s18, 0
    %p39 = por %p37, %p38
    %p40 = scmp.ne.s32.totalorder %s26, %s27
    %p41 = scmp.eq.s32.totalorder %s19, 2
    %p42 = por %p40, %p41
    %p44 = scmp.ne.s32.totalorder %s27, %s43
    %p45 = scmp.eq.s32.totalorder %s19, 0
    %p46 = por %p44, %p45
    %s48 = sadd.s32 %s47, 1
    %p51 = scmp.eq.s32.totalorder %s13, 2
    %p52 = scmp.ne.s32.totalorder %s47, %s49
    %p53 = scmp.eq.s32.totalorder %s13, 0
    %p54 = por %p52, %p53
    %p55 = scmp.ne.s32.totalorder %s47, %s49
    %p56 = scmp.eq.s32.totalorder %s18, 2
    %p57 = por %p55, %p56
    %p58 = scmp.ne.s32.totalorder %s49, %s50
    %p59 = scmp.eq.s32.totalorder %s18, 0
    %p60 = por %p58, %p59
    %p61 = scmp.ne.s32.totalorder %s49, %s50
    %p62 = scmp.eq.s32.totalorder %s19, 2
    %p63 = por %p61, %p62
    %p65 = scmp.ne.s32.totalorder %s50, %s64
    %p66 = scmp.eq.s32.totalorder %s19, 0
    %p67 = por %p65, %p66
    %s69 = sadd.s32 %s68, 1
    %p72 = scmp.eq.s32.totalorder %s13, 2
    %p73 = scmp.ne.s32.totalorder %s68, %s70
    %p74 = scmp.eq.s32.totalorder %s13, 0
    %p75 = por %p73, %p74
    %p76 = scmp.ne.s32.totalorder %s68, %s70
    %p77 = scmp.eq.s32.totalorder %s18, 2
    %p78 = por %p76, %p77
    %p79 = scmp.ne.s32.totalorder %s70, %s71
    %p80 = scmp.eq.s32.totalorder %s18, 0
    %p81 = por %p79, %p80
    %p82 = scmp.ne.s32.totalorder %s70, %s71
    %p83 = scmp.eq.s32.totalorder %s19, 2
    %p84 = por %p82, %p83
    %p86 = scmp.ne.s32.totalorder %s71, %s85
    %p87 = scmp.eq.s32.totalorder %s19, 0
    %p88 = por %p86, %p87
    %s90 = sadd.s32 %s89, 1
    %p93 = scmp.eq.s32.totalorder %s13, 2
    %p94 = scmp.ne.s32.totalorder %s89, %s91
    %p95 = scmp.eq.s32.totalorder %s13, 0
    %p96 = por %p94, %p95
    %p97 = scmp.ne.s32.totalorder %s89, %s91
    %p98 = scmp.eq.s32.totalorder %s18, 2
    %p99 = por %p97, %p98
    %p100 = scmp.ne.s32.totalorder %s91, %s92
    %p101 = scmp.eq.s32.totalorder %s18, 0
    %p102 = por %p100, %p101
    %p103 = scmp.ne.s32.totalorder %s91, %s92
    %p104 = scmp.eq.s32.totalorder %s19, 2
    %p105 = por %p103, %p104
    %p107 = scmp.ne.s32.totalorder %s92, %s106
    %p108 = scmp.eq.s32.totalorder %s19, 0
    %p109 = por %p107, %p108
    %s111 = sadd.s32 %s110, 1
    %p114 = scmp.eq.s32.totalorder %s13, 2
    %p115 = scmp.ne.s32.totalorder %s110, %s112
    %p116 = scmp.eq.s32.totalorder %s13, 0
    %p117 = por %p115, %p116
    %p118 = scmp.ne.s32.totalorder %s110, %s112
    %p119 = scmp.eq.s32.totalorder %s18, 2
    %p120 = por %p118, %p119
    %p121 = scmp.ne.s32.totalorder %s112, %s113
    %p122 = scmp.eq.s32.totalorder %s18, 0
    %p123 = por %p121, %p122
    %p124 = scmp.ne.s32.totalorder %s112, %s113
    %p125 = scmp.eq.s32.totalorder %s19, 2
    %p126 = por %p124, %p125
    %p128 = scmp.ne.s32.totalorder %s113, %s127
    %p129 = scmp.eq.s32.totalorder %s19, 0
    %p130 = por %p128, %p129
    %s131 = ssub.s32 %s13, %s20
    %p132 = scmp.eq.s32.totalorder %s131, 0
    %s134 = sadd.s32 %s133, 1
    %s135 = scalar_select %p132, %s133, %s134
    %p138 = pneg %p132
    %p139 = scmp.eq.s32.totalorder %s13, 2
    %p140 = por %p138, %p139
    %p141 = scmp.ne.s32.totalorder %s133, %s136
    %p142 = scmp.eq.s32.totalorder %s13, 0
    %p143 = por %p141, %p142
    %p144 = scmp.ne.s32.totalorder %s133, %s136
    %p145 = scmp.eq.s32.totalorder %s18, 2
    %p146 = por %p144, %p145
    %p147 = scmp.ne.s32.totalorder %s136, %s137
    %p148 = scmp.eq.s32.totalorder %s18, 0
    %p149 = por %p147, %p148
    %p150 = scmp.ne.s32.totalorder %s136, %s137
    %p151 = scmp.eq.s32.totalorder %s19, 2
    %p152 = por %p150, %p151
    %p154 = scmp.ne.s32.totalorder %s137, %s153
    %p155 = scmp.eq.s32.totalorder %s19, 0
    %p156 = por %p154, %p155
    %p157 = scmp.le.s32.totalorder 1, %s13
    %p158 = scmp.lt.s32.totalorder %s13, 4
    %p159 = pnand %p157, %p158
    %p160 = pneg %p159
    // Predicated region
    $region9: #{classifier_forward.1} parent=5 // pred_check
      _
    $region10: #{classifier_forward.1} parent=5 // pred_check_branch
      %162 = sbr.rel (%p159) target = $region12
    $region11: #{classifier_forward.1} parent=5 // pred_region
      %s163 = ssub.s32 %s13, 1
      // Predicated region
      $region13: #{classifier_forward.1} parent=11 // pred_check
        %p164 = pneg %p60
      $region14: #{classifier_forward.1} parent=11 // pred_check_branch
        %166 = sbr.rel (%p164) target = $region16
      $region15: #{classifier_forward.1} parent=11 // pred_region
        _
      $region16: #{classifier_forward.1} parent=11 // pred_fallthru
        _
      // Predicated region
      $region17: #{classifier_forward.1} parent=11 // pred_check
        %p167 = pneg %p81
      $region18: #{classifier_forward.1} parent=11 // pred_check_branch
        %169 = sbr.rel (%p167) target = $region20
      $region19: #{classifier_forward.1} parent=11 // pred_region
        _
      $region20: #{classifier_forward.1} parent=11 // pred_fallthru
        _
      // Predicated region
      $region21: #{classifier_forward.1} parent=11 // pred_check
        %p170 = pneg %p102
      $region22: #{classifier_forward.1} parent=11 // pred_check_branch
        %172 = sbr.rel (%p170) target = $region24
      $region23: #{classifier_forward.1} parent=11 // pred_region
        _
      $region24: #{classifier_forward.1} parent=11 // pred_fallthru
        _
      // Predicated region
      $region25: #{classifier_forward.1} parent=11 // pred_check
        %p173 = pneg %p123
      $region26: #{classifier_forward.1} parent=11 // pred_check_branch
        %175 = sbr.rel (%p173) target = $region28
      $region27: #{classifier_forward.1} parent=11 // pred_region
        _
      $region28: #{classifier_forward.1} parent=11 // pred_fallthru
        _
    $region12: #{classifier_forward.1} parent=5 // pred_fallthru
      _
    %p176 = scmp.lt.s32.totalorder %s13, 3
    // Predicated region
    $region29: #{classifier_forward.1} parent=5 // pred_check
      %p177 = pneg %p176
    $region30: #{classifier_forward.1} parent=5 // pred_check_branch
      %179 = sbr.rel (%p177) target = $region32
    $region31: #{classifier_forward.1} parent=5 // pred_region
      // Predicated region
      $region33: #{classifier_forward.1} parent=31 // pred_check
        %p180 = pneg %p33
      $region34: #{classifier_forward.1} parent=31 // pred_check_branch
        %182 = sbr.rel (%p180) target = $region36
      $region35: #{classifier_forward.1} parent=31 // pred_region
        %s183 = smul.u32 2, %s13
        %p184 = scmp.lt.s32.totalorder %s183, 5
        %s185 = scalar_select %p184, %s183, 5
        %s186 = smul.addr %s185, 8
        %s187 = scalar_lea.vmem %s0, %s186
        %s188 = smul.u32 2, %s13
      $region36: #{classifier_forward.1} parent=31 // pred_fallthru
        _
    $region32: #{classifier_forward.1} parent=5 // pred_fallthru
      _
    %p189 = scmp.le.s32.totalorder 1, %s13
    %p190 = scmp.lt.s32.totalorder %s13, 4
    %p191 = pnand %p189, %p190
    %p192 = pneg %p191
    // Predicated region
    $region37: #{classifier_forward.1} parent=5 // pred_check
      _
    $region38: #{classifier_forward.1} parent=5 // pred_check_branch
      %194 = sbr.rel (%p191) target = $region40
    $region39: #{classifier_forward.1} parent=5 // pred_region
      %s195 = ssub.s32 %s13, 1
      %s196 = smul.u32 2, %s18
      %p197 = scmp.lt.s32.totalorder %s196, 5
      %s198 = scalar_select %p197, %s196, 5
      %s199 = smul.addr %s198, 8
      %s200 = scalar_lea.vmem %s0, %s199
      %p201 = pneg %p39
      %p202 = pneg %p36
      %p203 = pneg %p60
      %p204 = pneg %p57
      %p205 = pneg %p81
      %p206 = pneg %p78
      %p207 = pneg %p102
      %p208 = pneg %p99
      %p209 = pneg %p123
      %p210 = pneg %p120
      %p211 = pneg %p149
      %p212 = pneg %p146
      %s213 = smul.u32 2, %s18
      %p214 = scmp.lt.s32.totalorder %s213, 5
      %s215 = scalar_select %p214, %s213, 5
      %s216 = smul.addr %s215, 8
      %s217 = scalar_lea.vmem %s5, %s216
      %s218 = smul.u32 2, %s18
      %p219 = scmp.lt.s32.totalorder %s218, 5
      %s220 = scalar_select %p219, %s218, 5
      %s221 = smul.addr %s220, 8
      %s222 = scalar_lea.vmem %s0, %s221
      %s223 = smul.u32 2, %s18
      %s224 = smul.u32 2, %s18
      %p225 = scmp.lt.s32.totalorder %s224, 5
      %s226 = scalar_select %p225, %s224, 5
      %s227 = smul.addr %s226, 8
      %s228 = scalar_lea.vmem %s5, %s227
      %s229 = smul.u32 2, %s18
      %v231 = vld [vmem:[%s222] sm:$0xff]
      %v232 = vld [vmem:[%s222 + $0x8] sm:$0xff]
      %233 = vadd.xlane.f32.xlu0 %v231
      %v234 = vpop.xlane.xlu0 %233
      %235 = vadd.xlane.f32.xlu0 %v232
      %v236 = vpop.xlane.xlu0 %235
      %v237 = vrcp.pop 128.0
      %v238 = vmul.f32 %v234, %v237
      %v239 = vmul.f32 %v236, %v237
      %v240 = vmul.f32 %v231, %v231
      %v241 = vmul.f32 %v232, %v232
      %242 = vadd.xlane.f32.xlu0 %v240
      %v243 = vpop.xlane.xlu0 %242
      %244 = vadd.xlane.f32.xlu0 %v241
      %v245 = vpop.xlane.xlu0 %244
      %v246 = vmul.f32 %v243, %v237
      %v247 = vmul.f32 %v245, %v237
      %v248 = vmul.f32 %v238, %v238
      %v249 = vmul.f32 %v239, %v239
      %v250 = vsub.f32 %v246, %v248
      %v251 = vsub.f32 %v247, %v249
      %v252 = vsub.f32 %v231, %v238
      %v253 = vsub.f32 %v232, %v239
      %v254 = vadd.f32 %v250, 1e-05
      %v255 = vadd.f32 %v251, 1e-05
      %v256 = vrsqrt.pop %v254
      %v257 = vrsqrt.pop %v255
      %v258 = vmul.f32 %v252, %v256
      %v259 = vmul.f32 %v253, %v257
      %v260 = vpack.c.bf16 %v259, %v258
      %v261 = vld [vmem:[%s1] sm:$0xf]
      %v262 = vld [vmem:[%s1 + $0x4] sm:$0xf]
      %v263 = vld [vmem:[%s1 + $0x8] sm:$0xf]
      %v264 = vld [vmem:[%s1 + $0xc] sm:$0xf]
      %v265 = vld [vmem:[%s1 + $0x10] sm:$0xf]
      %v266 = vld [vmem:[%s1 + $0x14] sm:$0xf]
      %v267 = vld [vmem:[%s1 + $0x18] sm:$0xf]
      %v268 = vld [vmem:[%s1 + $0x1c] sm:$0xf]
      %v269 = vld [vmem:[%s1 + $0x20] sm:$0xf]
      %v270 = vld [vmem:[%s1 + $0x24] sm:$0xf]
      %v271 = vld [vmem:[%s1 + $0x28] sm:$0xf]
      %v272 = vld [vmem:[%s1 + $0x2c] sm:$0xf]
      %v273 = vld [vmem:[%s1 + $0x30] sm:$0xf]
      %v274 = vld [vmem:[%s1 + $0x34] sm:$0xf]
      %v275 = vld [vmem:[%s1 + $0x38] sm:$0xf]
      %v276 = vld [vmem:[%s1 + $0x3c] sm:$0xf]
      %v277 = vld [vmem:[%s2] sm:$0x1]
      %v279 = vlaneseq
      %v280 = vshrl.u32 %v279, 7
      %v281 = vsub.s32 0, %v280
      %v282 = vrot.slane %v277, %v281
      %v300 = vunpack.c.l.b16 %v261
      %v301 = vunpack.c.l.b16 %v262
      %v302 = vunpack.c.l.b16 %v263
      %v303 = vunpack.c.l.b16 %v264
      %v304 = vunpack.c.l.b16 %v265
      %v305 = vunpack.c.l.b16 %v266
      %v306 = vunpack.c.l.b16 %v267
      %v307 = vunpack.c.l.b16 %v268
      %v308 = vunpack.c.l.b16 %v269
      %v309 = vunpack.c.l.b16 %v270
      %v310 = vunpack.c.l.b16 %v271
      %v311 = vunpack.c.l.b16 %v272
      %v312 = vunpack.c.l.b16 %v273
      %v313 = vunpack.c.l.b16 %v274
      %v314 = vunpack.c.l.b16 %v275
      %v315 = vunpack.c.l.b16 %v276
      %v316 = vpack.c.b16 %v301, %v300
      %v317 = vpack.c.b16 %v303, %v302
      %v318 = vpack.c.b16 %v305, %v304
      %v319 = vpack.c.b16 %v307, %v306
      %v320 = vpack.c.b16 %v309, %v308
      %v321 = vpack.c.b16 %v311, %v310
      %v322 = vpack.c.b16 %v313, %v312
      %v323 = vpack.c.b16 %v315, %v314
      %332 = vmatprep.subr.bf16.mxu0 0
      %333 = vmatpush1.bf16.msra.mxu0 %v316
      %334 = vmatprep.subr.bf16.mxu0 0
      %335 = vmatpush1.bf16.msra.mxu0 %v317
      %336 = vmatprep.subr.bf16.mxu0 0
      %337 = vmatpush1.bf16.msra.mxu0 %v318
      %338 = vmatprep.subr.bf16.mxu0 0
      %339 = vmatpush1.bf16.msra.mxu0 %v319
      %340 = vmatprep.subr.bf16.mxu0 0
      %341 = vmatpush1.bf16.msra.mxu0 %v320
      %342 = vmatprep.subr.bf16.mxu0 0
      %343 = vmatpush1.bf16.msra.mxu0 %v321
      %344 = vmatprep.subr.bf16.mxu0 0
      %345 = vmatpush1.bf16.msra.mxu0 %v322
      %346 = vmatprep.subr.bf16.mxu0 0
      %347 = vmatpush1.bf16.msra.mxu0 %v323
      %348 = vmatprep.subr.bf16.mxu0 0
      %349 = vmatpush1.bf16.msra.mxu0 0
      %350 = vmatprep.subr.bf16.mxu0 0
      %351 = vmatpush1.bf16.msra.mxu0 0
      %352 = vmatprep.subr.bf16.mxu0 0
      %353 = vmatpush1.bf16.msra.mxu0 0
      %354 = vmatprep.subr.bf16.mxu0 0
      %355 = vmatpush1.bf16.msra.mxu0 0
      %356 = vmatprep.subr.bf16.mxu0 0
      %357 = vmatpush1.bf16.msra.mxu0 0
      %358 = vmatprep.subr.bf16.mxu0 0
      %359 = vmatpush1.bf16.msra.mxu0 0
      %360 = vmatprep.subr.bf16.mxu0 0
      %361 = vmatpush1.bf16.msra.mxu0 0
      %362 = vmatprep.subr.bf16.mxu0 0
      %363 = vmatpush1.bf16.msra.mxu0 0
      %364 = vmatprep.mubr.bf16.mxu0 0
      %365 = vmatmul.mubr.bf16.gmra.mrb[0].mxu0 %v260
      %v366 = vpop.f32.mrb[0].mxu0
      %v367 = vadd.f32 %v282, %v366
      %v368 = vpop.f32.mrb[0].mxu0
      %v369 = vpop.f32.mrb[0].mxu0
      %v370 = vadd.f32 %v282, %v369
      %v371 = vpop.f32.mrb[0].mxu0
      %372 = vdwg.mxu0
      %v373 = vmul.f32 %v367, 0.5
      %v374 = vmul.f32 %v370, 0.5
      %v375 = vmul.f32 %v367, 0.70710677
      %v376 = vmul.f32 %v370, 0.70710677
      %v377 = verf.f32.pop %v375
      %v378 = verf.f32.pop %v376
      %v379 = vadd.f32 %v377, 1.0
      %v380 = vadd.f32 %v378, 1.0
      %v381 = vmul.f32 %v373, %v379
      %v382 = vmul.f32 %v374, %v380
      %383 = vadd.xlane.f32.xlu0 %v381
      %v384 = vpop.xlane.xlu0 %383
      %385 = vadd.xlane.f32.xlu0 %v382
      %v386 = vpop.xlane.xlu0 %385
      %v387 = vmul.f32 %v384, %v237
      %v388 = vmul.f32 %v386, %v237
      %v389 = vmul.f32 %v381, %v381
      %v390 = vmul.f32 %v382, %v382
      %391 = vadd.xlane.f32.xlu0 %v389
      %v392 = vpop.xlane.xlu0 %391
      %393 = vadd.xlane.f32.xlu0 %v390
      %v394 = vpop.xlane.xlu0 %393
      %v395 = vmul.f32 %v392, %v237
      %v396 = vmul.f32 %v394, %v237
      %v397 = vmul.f32 %v387, %v387
      %v398 = vmul.f32 %v388, %v388
      %v399 = vsub.f32 %v395, %v397
      %v400 = vsub.f32 %v396, %v398
      %v401 = vsub.f32 %v381, %v387
      %v402 = vsub.f32 %v382, %v388
      %v403 = vadd.f32 %v399, 1e-05
      %v404 = vadd.f32 %v400, 1e-05
      %v405 = vrsqrt.pop %v403
      %v406 = vrsqrt.pop %v404
      %v407 = vmul.f32 %v401, %v405
      %v408 = vmul.f32 %v402, %v406
      %v409 = vld [vmem:[%s3] sm:$0x1]
      %v411 = vlaneseq
      %v412 = vshrl.u32 %v411, 7
      %v413 = vsub.s32 0, %v412
      %v414 = vrot.slane %v409, %v413
      %v416 = vmul.f32 %v407, %v414
      %v417 = vmul.f32 %v408, %v414
      %418 = vadd.xlane.f32.xlu0 %v416
      %v419 = vpop.xlane.xlu0 %418
      %420 = vadd.xlane.f32.xlu0 %v417
      %v421 = vpop.xlane.xlu0 %420
      %v422 = vld [vmem:[#allocation2] sm:$0x1]
      %v424 = vlaneseq
      %v425 = vshrl.u32 %v424, 7
      %v426 = vsub.s32 0, %v425
      %v427 = vrot.slane %v422, %v426
      %v429 = vadd.f32 %v419, %v427
      %v430 = vadd.f32 %v421, %v427
      %v431 = vsub.f32 0.0, %v429
      %v432 = vsub.f32 0.0, %v430
      %v433 = vmul.f32 %v431, 1.442695
      %v434 = vpow.pop %v433
      %v435 = vmul.f32 %v432, 1.442695
      %v436 = vpow.pop %v435
      %v437 = vadd.f32 %v434, 1.0
      %v438 = vadd.f32 %v436, 1.0
      %v439 = vrcp.pop %v437
      %v440 = vmul.f32 1.0, %v439
      %v441 = vrcp.pop %v438
      %v442 = vmul.f32 1.0, %v441
      %v443 = vlaneseq
      %v444 = vand.u32 %v443, 127
      %vm445 = vcmp.eq.s32.totalorder %v444, 0
      %v446 = vsub.f32 1.0, %v440
      %v447 = vsub.f32 1.0, %v442
      %449 = vset.pattern.permute.xlu0 0
      %450 = vperm.xlu0 %449, %v446
      %v451 = vpop.permute.xlu0 %450
      %454 = vset.pattern.permute.xlu0 0
      %455 = vperm.xlu0 %454, %v447
      %v456 = vpop.permute.xlu0 %455
      %459 = vset.pattern.permute.xlu0 0
      %460 = vperm.xlu0 %459, %v440
      %v461 = vpop.permute.xlu0 %460
      %464 = vset.pattern.permute.xlu0 0
      %465 = vperm.xlu0 %464, %v442
      %v466 = vpop.permute.xlu0 %465
      %v468 = vsel %vm445, %v451, %v461
      %v469 = vsel %vm445, %v456, %v466
      %vm470 = vcmask 15360
      %471 = vst.msk [vmem:[%s228] sm:$0xff] %vm470, %v468
      %472 = vst.msk [vmem:[%s228 + $0x8] sm:$0xff] %vm470, %v469
      %s473 = smul.u32 2, %s18
      %p474 = scmp.lt.s32.totalorder %s473, 5
      %s475 = scalar_select %p474, %s473, 5
      %s476 = smul.addr %s475, 8
      %s477 = scalar_lea.vmem %s5, %s476
      // Predicated region
      $region41: #{classifier_forward.1} parent=39 // pred_check
        %p478 = pneg %p146
      $region42: #{classifier_forward.1} parent=39 // pred_check_branch
        %480 = sbr.rel (%p478) target = $region44
      $region43: #{classifier_forward.1} parent=39 // pred_region
        %s481 = smul.u32 2, %s18
      $region44: #{classifier_forward.1} parent=39 // pred_fallthru
        _
    $region40: #{classifier_forward.1} parent=5 // pred_fallthru
      _
    %p482 = scmp.le.s32.totalorder 2, %s13
    // Predicated region
    $region45: #{classifier_forward.1} parent=5 // pred_check
      %p483 = pneg %p482
    $region46: #{classifier_forward.1} parent=5 // pred_check_branch
      %485 = sbr.rel (%p483) target = $region48
    $region47: #{classifier_forward.1} parent=5 // pred_region
      %s486 = ssub.s32 %s13, 2
      // Predicated region
      $region49: #{classifier_forward.1} parent=47 // pred_check
        %p487 = pneg %p152
      $region50: #{classifier_forward.1} parent=47 // pred_check_branch
        %489 = sbr.rel (%p487) target = $region52
      $region51: #{classifier_forward.1} parent=47 // pred_region
        %s490 = smul.u32 2, %s19
        %p491 = scmp.lt.s32.totalorder %s490, 5
        %s492 = scalar_select %p491, %s490, 5
        %s493 = smul.addr %s492, 8
        %s494 = scalar_lea.vmem %s5, %s493
      $region52: #{classifier_forward.1} parent=47 // pred_fallthru
        _
    $region48: #{classifier_forward.1} parent=5 // pred_fallthru
      _
  $region6: #{classifier_forward.1} parent=0 // loop_footer
    %s17 = sadd.s32 1, %s13
  $region7: #{classifier_forward.1} parent=0 // loop_footer_branch
    %12 = sbr.rel target = $region3
  $region8: #{classifier_forward.1} parent=0 // loop_exit
    _

</llo_original>
